<compile_context>
chip_gen: v5e
topology: v5e:2x2
jax: 0.10.0
libtpu: 0.0.40
codegen_flags: <defaults>
</compile_context>

<pallas_src>
import functools

import jax
import jax.numpy as jnp
from jax.experimental import pallas as pl
from jax.experimental.pallas import tpu as pltpu

LANE = 128        # vreg lane width
CHUNK_ROWS = 256  # strip-mine granularity inside a block (256*128*4B = 128 KiB)


def _chip_defaults():
    """(max block rows, max shard count) per TPU generation."""
    kind = ""
    try:
        kind = jax.devices()[0].device_kind.lower()
    except Exception:  # pragma: no cover - CPU/interpret fallback
        pass
    if "v7" in kind:                       # v7x: 2 TCs, 3.2 TB/s, 64 MiB VMEM
        return 8192, 2
    if "v6" in kind:                       # v6e: 1 TC, 32 MiB scoped default
        return 8192, 1
    if "v5" in kind and ("lite" in kind or "v5e" in kind):
        return 4096, 1                     # v5e: 16 MiB scoped default
    if "v4" in kind or "v5p" in kind or "v5" in kind:
        return 8192, 2                     # megacore chips
    return 4096, 1                         # unknown: conservative


def _min_sublanes(dtype):
    """Minimum sublane tile for packed dtypes: 8 f32, 16 bf16, 32 int8/fp8."""
    return max(8, 32 // jnp.dtype(dtype).itemsize)


def _silog_partial_kernel(p_ref, t_ref, osum_ref, osq_ref, acc_s, acc_ss, *,
                          block_rows, chunk_rows, n_rows, blocks_per_shard,
                          needs_mask):
    """Accumulates per-lane sum(d) / sum(d^2) over the row-blocks of one shard."""
    i = pl.program_id(1)  # inner (reduction) axis

    @pl.when(i == 0)
    def _init():
        acc_s[...] = jnp.zeros_like(acc_s)
        acc_ss[...] = jnp.zeros_like(acc_ss)

    if needs_mask:
        c = pl.program_id(0)
        blk = c * blocks_per_shard + i       # logical block index in the slab
        base_row = blk * block_rows
    else:
        base_row = 0  # unused

    def chunk_sums(p_raw, t_raw, row0, nrows):
        # Cast in-kernel so sub-f32 inputs keep their HBM width.
        p = p_raw.astype(jnp.float32)
        t = t_raw.astype(jnp.float32)
        # One EUP log per element instead of two: d = log(max(p,1)/max(t,1)).
        d = jnp.log(jnp.maximum(p, 1.0) / jnp.maximum(t, 1.0))
        if needs_mask:
            # Mask BEFORE both reductions (garbage rows may be NaN).
            rows_left = n_rows - (base_row + row0)
            sub = jax.lax.broadcasted_iota(jnp.int32, (nrows, 1), 0)
            d = jnp.where(sub < rows_left, d, 0.0)
        return (jnp.sum(d, axis=0, keepdims=True),
                jnp.sum(d * d, axis=0, keepdims=True))

    full_chunks = block_rows // chunk_rows
    rem_rows = block_rows - full_chunks * chunk_rows

    s = jnp.zeros((1, LANE), jnp.float32)
    ss = jnp.zeros((1, LANE), jnp.float32)

    if full_chunks == 1 and rem_rows == 0:
        # Small block: one static full-ref read, no loop.
        cs, css = chunk_sums(p_ref[...], t_ref[...], 0, block_rows)
        s = s + cs
        ss = ss + css
    else:
        # Strip-mine the block so f32 temporaries stay a few hundred KiB.
        def body(ci, carry):
            s_acc, ss_acc = carry
            row0 = pl.multiple_of(ci * chunk_rows, chunk_rows)
            cs, css = chunk_sums(p_ref[pl.ds(row0, chunk_rows), :],
                                 t_ref[pl.ds(row0, chunk_rows), :],
                                 row0, chunk_rows)
            return s_acc + cs, ss_acc + css

        s, ss = jax.lax.fori_loop(0, full_chunks, body, (s, ss))

        if rem_rows > 0:
            row0 = full_chunks * chunk_rows  # static
            cs, css = chunk_sums(p_ref[row0:row0 + rem_rows, :],
                                 t_ref[row0:row0 + rem_rows, :],
                                 row0, rem_rows)
            s = s + cs
            ss = ss + css

    acc_s[...] = acc_s[...] + s
    acc_ss[...] = acc_ss[...] + ss

    @pl.when(i == pl.num_programs(1) - 1)
    def _finalize():
        osum_ref[...] = acc_s[...].reshape(osum_ref.shape)
        osq_ref[...] = acc_ss[...].reshape(osq_ref.shape)


def silog(predicted, target, *, max_block_rows=None):
    assert predicted.shape == target.shape
    n = predicted.size

    flat_p = predicted.reshape(-1)
    flat_t = target.reshape(-1)

    rows = n // LANE
    bulk = rows * LANE

    sum_d = jnp.float32(0.0)
    sum_dd = jnp.float32(0.0)

    if rows > 0:
        p2 = flat_p[:bulk].reshape(rows, LANE)
        t2 = flat_t[:bulk].reshape(rows, LANE)

        cap, max_shards = _chip_defaults()
        if max_block_rows is not None:
            cap = int(max_block_rows)

        min_sub = max(_min_sublanes(p2.dtype), _min_sublanes(t2.dtype))
        if rows <= cap:
            block_rows = rows                       # full extent: always legal
        else:
            block_rows = max((cap // min_sub) * min_sub, min_sub)

        nb = pl.cdiv(rows, block_rows)              # real row-blocks
        num_shards = max_shards if nb >= max_shards else 1
        bps = pl.cdiv(nb, num_shards)               # blocks per shard
        needs_mask = (num_shards * bps * block_rows) != rows

        if num_shards * bps == nb:
            in_map = lambda c, i: (c * bps + i, 0)
        else:
            # Keep the DMA in bounds; duplicated blocks are masked in-kernel.
            in_map = lambda c, i: (jnp.minimum(c * bps + i, nb - 1), 0)

        chunk_rows = min(block_rows, CHUNK_ROWS)

        itemsize = max(jnp.dtype(p2.dtype).itemsize,
                       jnp.dtype(t2.dtype).itemsize)
        cost = pl.CostEstimate(
            flops=6 * bulk,
            transcendentals=bulk,                   # one log per element
            bytes_accessed=2 * bulk * itemsize + 2 * num_shards * LANE * 4,
        )

        kernel = functools.partial(
            _silog_partial_kernel,
            block_rows=block_rows, chunk_rows=chunk_rows, n_rows=rows,
            blocks_per_shard=bps, needs_mask=needs_mask)

        part_s, part_ss = pl.pallas_call(
            kernel,
            out_shape=(
                jax.ShapeDtypeStruct((num_shards, 1, LANE), jnp.float32),
                jax.ShapeDtypeStruct((num_shards, 1, LANE), jnp.float32),
            ),
            grid_spec=pltpu.PrefetchScalarGridSpec(
                num_scalar_prefetch=0,
                grid=(num_shards, bps),
                in_specs=[
                    pl.BlockSpec((block_rows, LANE), in_map),
                    pl.BlockSpec((block_rows, LANE), in_map),
                ],
                out_specs=(
                    pl.BlockSpec((1, 1, LANE), lambda c, i: (c, 0, 0)),
                    pl.BlockSpec((1, 1, LANE), lambda c, i: (c, 0, 0)),
                ),
                scratch_shapes=[
                    pltpu.VMEM((1, LANE), jnp.float32),  # per-lane sum(d)
                    pltpu.VMEM((1, LANE), jnp.float32),  # per-lane sum(d^2)
                ],
            ),
            compiler_params=pltpu.CompilerParams(
                dimension_semantics=("parallel", "arbitrary")),
            cost_estimate=cost,
        )(p2, t2)

        sum_d = sum_d + jnp.sum(part_s)
        sum_dd = sum_dd + jnp.sum(part_ss)

    if bulk < n:
        # Ragged tail (< 128 elements): plain JAX, negligible cost.
        tp = flat_p[bulk:].astype(jnp.float32)
        tt = flat_t[bulk:].astype(jnp.float32)
        dt = jnp.log(jnp.maximum(tp, 1.0)) - jnp.log(jnp.maximum(tt, 1.0))
        sum_d = sum_d + jnp.sum(dt)
        sum_dd = sum_dd + jnp.sum(dt * dt)

    n_f = jnp.float32(n)
    mean_d = sum_d / n_f
    s1 = sum_dd / n_f
    var = jnp.maximum(s1 - mean_d * mean_d, 0.0)  # guard sqrt of tiny negative
    return jnp.sqrt(var) * 100.0


def silog_ref(predicted, target):
    """Pure-JAX reference mirroring the PyTorch module."""
    tl = jnp.log(jnp.maximum(target.astype(jnp.float32), 1.0))
    pl_ = jnp.log(jnp.maximum(predicted.astype(jnp.float32), 1.0))
    d = pl_ - tl
    s1 = jnp.mean(d ** 2)
    s2 = jnp.mean(d) ** 2
    return jnp.sqrt(s1 - s2) * 100.0


if __name__ == "__main__":
    key = jax.random.PRNGKey(0)

    # 1) depth-map-like NCHW input, numel divisible by 128 (no tail, no mask)
    kp, kt, key = jax.random.split(key, 3)
    shape = (2, 4, 16, 16)
    p1 = jax.random.uniform(kp, shape, jnp.float32, 0.5, 10.0)
    t1 = jax.random.uniform(kt, shape, jnp.float32, 0.5, 10.0)
    out1 = jax.block_until_ready(silog(p1, t1))
    ref1 = silog_ref(p1, t1)
    assert jnp.allclose(out1, ref1, rtol=1e-4, atol=1e-4), (out1, ref1)

    # 2) ragged numel (exercises the plain-JAX tail path)
    kp, kt, key = jax.random.split(key, 3)
    shape = (3, 1, 19, 21)
    p2 = jax.random.uniform(kp, shape, jnp.float32, 0.5, 10.0)
    t2 = jax.random.uniform(kt, shape, jnp.float32, 0.5, 10.0)
    out2 = jax.block_until_ready(silog(p2, t2))
    ref2 = silog_ref(p2, t2)
    assert jnp.allclose(out2, ref2, rtol=1e-4, atol=1e-4), (out2, ref2)

    # 3) small block override -> multi-block grid + in-kernel ragged-row mask
    kp, kt, key = jax.random.split(key, 3)
    shape = (5, 1, 16, 33)
    p3 = jax.random.uniform(kp, shape, jnp.float32, 0.5, 10.0)
    t3 = jax.random.uniform(kt, shape, jnp.float32, 0.5, 10.0)
    out3 = jax.block_until_ready(silog(p3, t3, max_block_rows=8))
    ref3 = silog_ref(p3, t3)
    assert jnp.allclose(out3, ref3, rtol=1e-4, atol=1e-4), (out3, ref3)

    # 4) block larger than CHUNK_ROWS -> exercises strip-mined fori_loop + tail chunk
    kp, kt, key = jax.random.split(key, 3)
    shape = (2, 3, 64, 128)
    p4 = jax.random.uniform(kp, shape, jnp.float32, 0.5, 10.0)
    t4 = jax.random.uniform(kt, shape, jnp.float32, 0.5, 10.0)
    out4 = jax.block_until_ready(silog(p4, t4))
    ref4 = silog_ref(p4, t4)
    assert jnp.allclose(out4, ref4, rtol=1e-4, atol=1e-4), (out4, ref4)

    print("KERNEL_OK")
</pallas_src>

<mosaic_0001>
module attributes {stable_mosaic.version = 11 : i64} {
  func.func @_silog_partial_kernel(%arg0: i32, %arg1: i32, %arg2: memref<16x128xf32, #tpu.memory_space<vmem>>, %arg3: memref<16x128xf32, #tpu.memory_space<vmem>>, %arg4: memref<1x1x128xf32, #tpu.memory_space<vmem>>, %arg5: memref<1x1x128xf32, #tpu.memory_space<vmem>>, %arg6: memref<1x128xf32, #tpu.memory_space<vmem>>, %arg7: memref<1x128xf32, #tpu.memory_space<vmem>>) attributes {dimension_semantics = [#tpu.dimension_semantics<parallel>, #tpu.dimension_semantics<arbitrary>], iteration_bounds = array<i64: 1, 1>, scalar_prefetch = 0 : i64, scratch_operands = 2 : i64, tpu.core_type = #tpu.core_type<tc>, window_params = [{transform_indices = @transform_0, window_bounds = array<i64: 16, 128>}, {transform_indices = @transform_1, window_bounds = array<i64: 16, 128>}, {transform_indices = @transform_2, window_bounds = array<i64: 1, 1, 128>}, {transform_indices = @transform_3, window_bounds = array<i64: 1, 1, 128>}]} {
    %c0_i32 = arith.constant 0 : i32
    %0 = arith.cmpi eq, %arg1, %c0_i32 : i32
    %1 = arith.extui %0 : i1 to i32
    %c0_i32_0 = arith.constant 0 : i32
    %2 = arith.cmpi ne, %1, %c0_i32_0 : i32
    scf.if %2 {
      %cst_19 = arith.constant 0.000000e+00 : f32
      %29 = vector.broadcast %cst_19 : f32 to vector<1x128xf32>
      %c0_20 = arith.constant 0 : index
      %c0_21 = arith.constant 0 : index
      %30 = vector.load %arg6[%c0_20, %c0_21] : memref<1x128xf32, #tpu.memory_space<vmem>>, vector<1x128xf32>
      tpu.vector_store %arg6[%c0_20, %c0_21], %29 {strides = array<i32>} : memref<1x128xf32, #tpu.memory_space<vmem>>, vector<1x128xf32>,
      %cst_22 = arith.constant 0.000000e+00 : f32
      %31 = vector.broadcast %cst_22 : f32 to vector<1x128xf32>
      %c0_23 = arith.constant 0 : index
      %c0_24 = arith.constant 0 : index
      %32 = vector.load %arg7[%c0_23, %c0_24] : memref<1x128xf32, #tpu.memory_space<vmem>>, vector<1x128xf32>
      tpu.vector_store %arg7[%c0_23, %c0_24], %31 {strides = array<i32>} : memref<1x128xf32, #tpu.memory_space<vmem>>, vector<1x128xf32>,
    } else {
    }
    %cst = arith.constant 0.000000e+00 : f32
    %3 = vector.broadcast %cst : f32 to vector<1x128xf32>
    %cst_1 = arith.constant 0.000000e+00 : f32
    %4 = vector.broadcast %cst_1 : f32 to vector<1x128xf32>
    %c0 = arith.constant 0 : index
    %c0_2 = arith.constant 0 : index
    %5 = vector.load %arg2[%c0, %c0_2] : memref<16x128xf32, #tpu.memory_space<vmem>>, vector<16x128xf32>
    %c0_3 = arith.constant 0 : index
    %c0_4 = arith.constant 0 : index
    %6 = vector.load %arg3[%c0_3, %c0_4] : memref<16x128xf32, #tpu.memory_space<vmem>>, vector<16x128xf32>
    %cst_5 = arith.constant 1.000000e+00 : f32
    %7 = vector.broadcast %cst_5 : f32 to vector<16x128xf32>
    %8 = arith.maximumf %5, %7 : vector<16x128xf32>
    %cst_6 = arith.constant 1.000000e+00 : f32
    %9 = vector.broadcast %cst_6 : f32 to vector<16x128xf32>
    %10 = arith.maximumf %6, %9 : vector<16x128xf32>
    %11 = arith.divf %8, %10 : vector<16x128xf32>
    %12 = math.log %11 : vector<16x128xf32>
    %cst_7 = arith.constant dense<0.000000e+00> : vector<128xf32>
    %13 = vector.multi_reduction <add>, %12, %cst_7 [0] : vector<16x128xf32> to vector<128xf32>
    %14 = vector.shape_cast %13 : vector<128xf32> to vector<1x128xf32>
    %15 = arith.mulf %12, %12 : vector<16x128xf32>
    %cst_8 = arith.constant dense<0.000000e+00> : vector<128xf32>
    %16 = vector.multi_reduction <add>, %15, %cst_8 [0] : vector<16x128xf32> to vector<128xf32>
    %17 = vector.shape_cast %16 : vector<128xf32> to vector<1x128xf32>
    %18 = arith.addf %3, %14 : vector<1x128xf32>
    %19 = arith.addf %4, %17 : vector<1x128xf32>
    %c0_9 = arith.constant 0 : index
    %c0_10 = arith.constant 0 : index
    %20 = vector.load %arg6[%c0_9, %c0_10] : memref<1x128xf32, #tpu.memory_space<vmem>>, vector<1x128xf32>
    %21 = arith.addf %20, %18 : vector<1x128xf32>
    %c0_11 = arith.constant 0 : index
    %c0_12 = arith.constant 0 : index
    %22 = vector.load %arg6[%c0_11, %c0_12] : memref<1x128xf32, #tpu.memory_space<vmem>>, vector<1x128xf32>
    tpu.vector_store %arg6[%c0_11, %c0_12], %21 {strides = array<i32>} : memref<1x128xf32, #tpu.memory_space<vmem>>, vector<1x128xf32>,
    %c0_13 = arith.constant 0 : index
    %c0_14 = arith.constant 0 : index
    %23 = vector.load %arg7[%c0_13, %c0_14] : memref<1x128xf32, #tpu.memory_space<vmem>>, vector<1x128xf32>
    %24 = arith.addf %23, %19 : vector<1x128xf32>
    %c0_15 = arith.constant 0 : index
    %c0_16 = arith.constant 0 : index
    %25 = vector.load %arg7[%c0_15, %c0_16] : memref<1x128xf32, #tpu.memory_space<vmem>>, vector<1x128xf32>
    tpu.vector_store %arg7[%c0_15, %c0_16], %24 {strides = array<i32>} : memref<1x128xf32, #tpu.memory_space<vmem>>, vector<1x128xf32>,
    %c0_i32_17 = arith.constant 0 : i32
    %26 = arith.cmpi eq, %arg1, %c0_i32_17 : i32
    %27 = arith.extui %26 : i1 to i32
    %c0_i32_18 = arith.constant 0 : i32
    %28 = arith.cmpi ne, %27, %c0_i32_18 : i32
    scf.if %28 {
      %c0_19 = arith.constant 0 : index
      %c0_20 = arith.constant 0 : index
      %29 = vector.load %arg6[%c0_19, %c0_20] : memref<1x128xf32, #tpu.memory_space<vmem>>, vector<1x128xf32>
      %30 = vector.shape_cast %29 : vector<1x128xf32> to vector<1x1x128xf32>
      %c0_21 = arith.constant 0 : index
      %c0_22 = arith.constant 0 : index
      %c0_23 = arith.constant 0 : index
      %31 = vector.load %arg4[%c0_21, %c0_22, %c0_23] : memref<1x1x128xf32, #tpu.memory_space<vmem>>, vector<1x1x128xf32>
      tpu.vector_store %arg4[%c0_21, %c0_22, %c0_23], %30 {strides = array<i32>} : memref<1x1x128xf32, #tpu.memory_space<vmem>>, vector<1x1x128xf32>,
      %c0_24 = arith.constant 0 : index
      %c0_25 = arith.constant 0 : index
      %32 = vector.load %arg7[%c0_24, %c0_25] : memref<1x128xf32, #tpu.memory_space<vmem>>, vector<1x128xf32>
      %33 = vector.shape_cast %32 : vector<1x128xf32> to vector<1x1x128xf32>
      %c0_26 = arith.constant 0 : index
      %c0_27 = arith.constant 0 : index
      %c0_28 = arith.constant 0 : index
      %34 = vector.load %arg5[%c0_26, %c0_27, %c0_28] : memref<1x1x128xf32, #tpu.memory_space<vmem>>, vector<1x1x128xf32>
      tpu.vector_store %arg5[%c0_26, %c0_27, %c0_28], %33 {strides = array<i32>} : memref<1x1x128xf32, #tpu.memory_space<vmem>>, vector<1x1x128xf32>,
    } else {
    }
    return
  }
  func.func @transform_0(%arg0: i32, %arg1: i32) -> (i32, i32) {
    %c1_i32 = arith.constant 1 : i32
    %0 = arith.muli %arg0, %c1_i32 : i32
    %1 = arith.addi %0, %arg1 : i32
    %c0_i32 = arith.constant 0 : i32
    %c0_i32_0 = arith.constant 0 : i32
    return %1, %c0_i32 : i32, i32
  }
  func.func @transform_1(%arg0: i32, %arg1: i32) -> (i32, i32) {
    %c1_i32 = arith.constant 1 : i32
    %0 = arith.muli %arg0, %c1_i32 : i32
    %1 = arith.addi %0, %arg1 : i32
    %c0_i32 = arith.constant 0 : i32
    %c0_i32_0 = arith.constant 0 : i32
    return %1, %c0_i32 : i32, i32
  }
  func.func @transform_2(%arg0: i32, %arg1: i32) -> (i32, i32, i32) {
    %c0_i32 = arith.constant 0 : i32
    %c0_i32_0 = arith.constant 0 : i32
    %c0_i32_1 = arith.constant 0 : i32
    return %arg0, %c0_i32, %c0_i32_0 : i32, i32, i32
  }
  func.func @transform_3(%arg0: i32, %arg1: i32) -> (i32, i32, i32) {
    %c0_i32 = arith.constant 0 : i32
    %c0_i32_0 = arith.constant 0 : i32
    %c0_i32_1 = arith.constant 0 : i32
    return %arg0, %c0_i32, %c0_i32_0 : i32, i32, i32
  }
}

</mosaic_0001>

<llo_original>
// kernel: tpu_custom_call.1
$region0: #{tpu_custom_call.1}
  #allocation0 [shape = 'u32[]', space=smem, size = 0x4, offset = 0x4, fixed_abs, tag = 'smem constant byte address 0x4 - core index']
  #allocation1 [shape = 'u32[72,128]{1,0:T(1,128)}', space=vmem, size = 0x9000, scoped, tag = 'internal scratch']
  #allocation2 [shape = 'f32[1,128]{1,0:T(1,128)}', space=vmem, size = 0x200, scoped, tag = 'scratch operand']
  #allocation3 [shape = 'f32[1,128]{1,0:T(1,128)}', space=vmem, size = 0x200, scoped, tag = 'scratch operand']
  %s0 = inlined_call_operand.hbm [shape: f32[16,128], index: 0, kind: input, shape index: {}]
  %s1 = inlined_call_operand.hbm [shape: f32[16,128], index: 1, kind: input, shape index: {}]
  %s2 = inlined_call_operand.hbm [shape: f32[1,1,128], index: 2, kind: output, shape index: {0}]
  %s3 = inlined_call_operand.hbm [shape: f32[1,1,128], index: 3, kind: output, shape index: {1}]
  %4 = xla_tuple %s2, %s3
  %s5 = sld [smem:[#allocation0]]
  $region42: #{tpu_custom_call.1} parent=0
    _
  %s7 = ssub.s32 1, %s5
  %s8 = scalar_select 0, %s7, %s5
  $region1: #{tpu_custom_call.1} parent=0
    #allocation4 [shape = 'u8[8192]{0}', space=vmem, size = 0x2000, scoped, tag = 'input window, operand 0, single buffered']
    #allocation5 [shape = 's32[1]{0}', space=sflag, size = 0x4, scoped, tag = 'scoped memory for tpu_custom_call.1']
    #allocation6 [shape = 's32[1]{0}', space=sflag, size = 0x4, scoped, tag = 'scoped memory for tpu_custom_call.1']
    #allocation7 [shape = 'u8[8192]{0}', space=vmem, size = 0x2000, scoped, tag = 'input window, operand 1, single buffered']
    #allocation8 [shape = 's32[1]{0}', space=sflag, size = 0x4, scoped, tag = 'scoped memory for tpu_custom_call.1']
    #allocation9 [shape = 'u8[512]{0}', space=vmem, size = 0x400, scoped, tag = 'output window, operand 0, single buffered']
    #allocation10 [shape = 'u8[512]{0}', space=vmem, size = 0x400, scoped, tag = 'output window, operand 1, single buffered']
    #allocation11 [shape = 's32[1]{0}', space=sflag, size = 0x4, scoped, tag = 'scoped memory for tpu_custom_call.1']
    %9 = vsyncpa [#allocation5], 0
    %10 = vsyncpa [#allocation8], 0
    %11 = vsyncpa [#allocation6], 0
    %12 = vsyncpa [#allocation11], 0
    // Predicated region
    $region2: #{tpu_custom_call.1} parent=1 // pred_check
      _
    $region3: #{tpu_custom_call.1} parent=1 // pred_check_branch
      %14 = sbr.rel (0) target = $region5
    $region4: #{tpu_custom_call.1} parent=1 // pred_region
      %s15 = sadd.s32 0, 0
      %s16 = smul.u32 2, %s15
      %18 = vsyncadd [#allocation5], 0
      %s19 = smul.addr %s16, 8
      %s20 = scalar_lea.hbm %s0, %s19
      %s21 = sshll.u32 %s20, 4
      %s22 = int_to_ptr.hbm [resolvable:$true] %s21
      %s23 = sshll.u32 [#allocation4], 4
      %s24 = int_to_ptr.vmem [resolvable:$true] %s23
      %29 = dma.hbm_to_vmem [thread:$0]  %s22, 256, %s24, [#allocation5], 128, 128, 8
    $region5: #{tpu_custom_call.1} parent=1 // pred_fallthru
      _
    // Predicated region
    $region6: #{tpu_custom_call.1} parent=1 // pred_check
      _
    $region7: #{tpu_custom_call.1} parent=1 // pred_check_branch
      %31 = sbr.rel (0) target = $region9
    $region8: #{tpu_custom_call.1} parent=1 // pred_region
      %s32 = sadd.s32 0, 0
      %s33 = smul.u32 2, %s32
      %35 = vsyncadd [#allocation8], 0
      %s36 = smul.addr %s33, 8
      %s37 = scalar_lea.hbm %s1, %s36
      %s38 = sshll.u32 %s37, 4
      %s39 = int_to_ptr.hbm [resolvable:$true] %s38
      %s40 = sshll.u32 [#allocation7], 4
      %s41 = int_to_ptr.vmem [resolvable:$true] %s40
      %46 = dma.hbm_to_vmem [thread:$0]  %s39, 256, %s41, [#allocation8], 128, 128, 8
    $region9: #{tpu_custom_call.1} parent=1 // pred_fallthru
      _
    // Predicated region
    $region10: #{tpu_custom_call.1} parent=1 // pred_check
      _
    $region11: #{tpu_custom_call.1} parent=1 // pred_check_branch
      %48 = sbr.rel (0) target = $region13
    $region12: #{tpu_custom_call.1} parent=1 // pred_region
      %50 = dma.done [#allocation5], 256
    $region13: #{tpu_custom_call.1} parent=1 // pred_fallthru
      _
    // Predicated region
    $region14: #{tpu_custom_call.1} parent=1 // pred_check
      _
    $region15: #{tpu_custom_call.1} parent=1 // pred_check_branch
      %52 = sbr.rel (0) target = $region17
    $region16: #{tpu_custom_call.1} parent=1 // pred_region
      %54 = dma.done [#allocation8], 256
    $region17: #{tpu_custom_call.1} parent=1 // pred_fallthru
      _
    %s55 = sadd.s32 0, 0
    %s56 = smul.u32 2, %s55
    %s57 = sadd.s32 0, 0
    %s58 = smul.u32 2, %s57
    %p59 = scmp.eq.s32.totalorder 0, 0
    // Predicated region
    $region18: #{tpu_custom_call.1} parent=1 // pred_check
      %p60 = pneg %p59
    $region19: #{tpu_custom_call.1} parent=1 // pred_check_branch
      %62 = sbr.rel (%p60) target = $region21
    $region20: #{tpu_custom_call.1} parent=1 // pred_region
      %63 = vst [vmem:[#allocation2] sm:$0x1] 0.0
      %64 = vst [vmem:[#allocation3] sm:$0x1] 0.0
    $region21: #{tpu_custom_call.1} parent=1 // pred_fallthru
      _
    %v65 = vld [vmem:[#allocation4] sm:$0xff]
    %v66 = vld [vmem:[#allocation4 + $0x8] sm:$0xff]
    %v67 = vld [vmem:[#allocation7] sm:$0xff]
    %v68 = vld [vmem:[#allocation7 + $0x8] sm:$0xff]
    %v69 = vmax.f32 %v65, 1.0
    %v70 = vmax.f32 %v66, 1.0
    %v71 = vmax.f32 %v67, 1.0
    %v72 = vmax.f32 %v68, 1.0
    %v73 = vrcp.pop %v71
    %v74 = vmul.f32 %v71, %v73
    %v75 = vsub.f32 1.0, %v74
    %v76 = vmul.f32 %v73, %v75
    %v77 = vadd.f32 %v73, %v76
    %vm78 = vweird.f32 %v71
    %vm79 = vweird.f32 %v73
    %vm80 = vmor %vm78, %vm79
    %v81 = vsel %vm80, %v73, %v77
    %v82 = vand.u32 2147483647, %v71
    %vm83 = vcmp.eq.f32.partialorder %v82, 8.507059e+37
    %v84 = vand.u32 %v71, 2147483648
    %v85 = vor.u32 1.1754944e-38, %v84
    %v86 = vsel %vm83, %v85, %v81
    %v87 = vmul.f32 %v69, %v86
    %v88 = vrcp.pop %v72
    %v89 = vmul.f32 %v72, %v88
    %v90 = vsub.f32 1.0, %v89
    %v91 = vmul.f32 %v88, %v90
    %v92 = vadd.f32 %v88, %v91
    %vm93 = vweird.f32 %v72
    %vm94 = vweird.f32 %v88
    %vm95 = vmor %vm93, %vm94
    %v96 = vsel %vm95, %v88, %v92
    %v97 = vand.u32 2147483647, %v72
    %vm98 = vcmp.eq.f32.partialorder %v97, 8.507059e+37
    %v99 = vand.u32 %v72, 2147483648
    %v100 = vor.u32 1.1754944e-38, %v99
    %v101 = vsel %vm98, %v100, %v96
    %v102 = vmul.f32 %v70, %v101
    %v103 = vlog2.pop %v87
    %v104 = vmul.f32 %v103, 0.6931472
    %v105 = vlog2.pop %v102
    %v106 = vmul.f32 %v105, 0.6931472
    %v107 = vadd.f32 %v104, %v106
    %v108 = vrot.slane %v107, 4
    %v109 = vadd.f32 %v107, %v108
    %v110 = vrot.slane %v109, 2
    %v111 = vadd.f32 %v109, %v110
    %v112 = vrot.slane %v111, 1
    %v113 = vadd.f32 %v111, %v112
    %v114 = vmul.f32 %v104, %v104
    %v115 = vmul.f32 %v106, %v106
    %v116 = vadd.f32 %v114, %v115
    %v117 = vrot.slane %v116, 4
    %v118 = vadd.f32 %v116, %v117
    %v119 = vrot.slane %v118, 2
    %v120 = vadd.f32 %v118, %v119
    %v121 = vrot.slane %v120, 1
    %v122 = vadd.f32 %v120, %v121
    %v123 = vadd.f32 %v113, 0.0
    %v124 = vadd.f32 %v122, 0.0
    %v125 = vld [vmem:[#allocation2] sm:$0x1]
    %v126 = vadd.f32 %v125, %v123
    %127 = vst [vmem:[#allocation2] sm:$0x1] %v126
    %v128 = vld [vmem:[#allocation3] sm:$0x1]
    %v129 = vadd.f32 %v128, %v124
    %130 = vst [vmem:[#allocation3] sm:$0x1] %v129
    // Predicated region
    $region22: #{tpu_custom_call.1} parent=1 // pred_check
      %p131 = pneg %p59
    $region23: #{tpu_custom_call.1} parent=1 // pred_check_branch
      %133 = sbr.rel (%p131) target = $region25
    $region24: #{tpu_custom_call.1} parent=1 // pred_region
      %v134 = vld [vmem:[#allocation2] sm:$0x1]
      %135 = vst [vmem:[#allocation9] sm:$0x1] %v134
      %v136 = vld [vmem:[#allocation3] sm:$0x1]
      %137 = vst [vmem:[#allocation10] sm:$0x1] %v136
    $region25: #{tpu_custom_call.1} parent=1 // pred_fallthru
      _
    // Predicated region
    $region26: #{tpu_custom_call.1} parent=1 // pred_check
      _
    $region27: #{tpu_custom_call.1} parent=1 // pred_check_branch
      %139 = sbr.rel (0) target = $region29
    $region28: #{tpu_custom_call.1} parent=1 // pred_region
      %141 = vsyncadd [#allocation6], 0
      %s143 = sshll.u32 [#allocation9], 4
      %s144 = int_to_ptr.vmem [resolvable:$true] %s143
      %s145 = sshll.u32 %s2, 4
      %s146 = int_to_ptr.hbm [resolvable:$true] %s145
      %148 = dma.vmem_to_hbm [thread:$0]  %s144, 16, %s146, [#allocation6]
    $region29: #{tpu_custom_call.1} parent=1 // pred_fallthru
      _
    // Predicated region
    $region30: #{tpu_custom_call.1} parent=1 // pred_check
      _
    $region31: #{tpu_custom_call.1} parent=1 // pred_check_branch
      %150 = sbr.rel (0) target = $region33
    $region32: #{tpu_custom_call.1} parent=1 // pred_region
      %152 = vsyncadd [#allocation11], 0
      %s154 = sshll.u32 [#allocation10], 4
      %s155 = int_to_ptr.vmem [resolvable:$true] %s154
      %s156 = sshll.u32 %s3, 4
      %s157 = int_to_ptr.hbm [resolvable:$true] %s156
      %159 = dma.vmem_to_hbm [thread:$0]  %s155, 16, %s157, [#allocation11]
    $region33: #{tpu_custom_call.1} parent=1 // pred_fallthru
      _
    // Predicated region
    $region34: #{tpu_custom_call.1} parent=1 // pred_check
      _
    $region35: #{tpu_custom_call.1} parent=1 // pred_check_branch
      %161 = sbr.rel (0) target = $region37
    $region36: #{tpu_custom_call.1} parent=1 // pred_region
      %163 = dma.done [#allocation6], 16
    $region37: #{tpu_custom_call.1} parent=1 // pred_fallthru
      _
    // Predicated region
    $region38: #{tpu_custom_call.1} parent=1 // pred_check
      _
    $region39: #{tpu_custom_call.1} parent=1 // pred_check_branch
      %165 = sbr.rel (0) target = $region41
    $region40: #{tpu_custom_call.1} parent=1 // pred_region
      %167 = dma.done [#allocation11], 16
    $region41: #{tpu_custom_call.1} parent=1 // pred_fallthru
      _
    %168 = vsyncpa [#allocation5], 1
    %169 = vsyncpa [#allocation8], 1
    %170 = vsyncpa [#allocation6], 1
    %171 = vsyncpa [#allocation11], 1

</llo_original>
